<compile_context>
chip_gen: v7x
topology: tpu7x:2x2x1
jax: 0.10.0
libtpu: 0.0.40
codegen_flags: <defaults>
</compile_context>

<pallas_src>
import math
from functools import partial

import jax
import jax.numpy as jnp
from jax import lax
from jax.experimental import pallas as pl
from jax.experimental.pallas import tpu as pltpu


def mha_kernel(x_ref, wq_ref, wkv_ref, wp_ref, bp_ref, o_ref, kv_ref, ho_ref,
               *, num_heads, head_dim):
    # x_ref  : (1, T, E)        bf16  full sequence for batch b
    # wq_ref : (E, H*Dh)        bf16  query weights, head-major, pre-scaled by 1/sqrt(Dh)
    # wkv_ref: (E, 2*H*Dh)      bf16  [K heads | V heads], head-major columns
    # wp_ref : (E, E)           bf16  output projection
    # bp_ref : (1, E)           f32   output projection bias
    # o_ref  : (1, block_q, E)  f32
    # kv_ref : (T, 2*H*Dh)      bf16  VMEM scratch: cached K/V projection (per batch)
    # ho_ref : (block_q, E)     bf16  VMEM scratch: concatenated head outputs
    H, Dh = num_heads, head_dim
    block_q = o_ref.shape[1]
    T = x_ref.shape[1]
    qi = pl.program_id(1)

    # K/V projection over the FULL sequence: computed once per batch element
    # (first query block) and carried across query blocks in VMEM scratch.
    @pl.when(qi == 0)
    def _():
        kv_ref[...] = jnp.dot(
            x_ref[0], wkv_ref[...], preferred_element_type=jnp.float32
        ).astype(jnp.bfloat16)

    q_start = pl.multiple_of(qi * block_q, block_q)
    x_q = x_ref[0, pl.ds(q_start, block_q), :]                     # (block_q, E) bf16

    # Query projection for this block (scale already folded into the weights).
    q_all = jnp.dot(x_q, wq_ref[...],
                    preferred_element_type=jnp.float32).astype(jnp.bfloat16)

    # Causal mask for this query block, from block offsets only.
    q_pos = q_start + lax.broadcasted_iota(jnp.int32, (block_q, T), 0)
    k_pos = lax.broadcasted_iota(jnp.int32, (block_q, T), 1)
    causal = q_pos >= k_pos
    neg_big = jnp.float32(-1e30)   # finite: a causal row always keeps its diagonal

    for h in range(H):             # static, small H; matmuls stay 2-D
        q_h = q_all[:, h * Dh:(h + 1) * Dh]                        # (bq, Dh) bf16
        k_h = kv_ref[:, h * Dh:(h + 1) * Dh]                       # (T, Dh)  bf16
        v_h = kv_ref[:, (H + h) * Dh:(H + h + 1) * Dh]             # (T, Dh)  bf16

        # q @ k^T without materializing a transpose.
        s = lax.dot_general(q_h, k_h, (((1,), (1,)), ((), ())),
                            preferred_element_type=jnp.float32)    # (bq, T) f32
        s = jnp.where(causal, s, neg_big)
        s = s - jnp.max(s, axis=-1, keepdims=True)
        p = jnp.exp(s)
        p = (p * pl.reciprocal(jnp.sum(p, axis=-1, keepdims=True),
                               approx=True)).astype(jnp.bfloat16)

        o_h = jnp.dot(p, v_h, preferred_element_type=jnp.float32)  # (bq, Dh) f32
        # Static lane-offset write; all heads together fill (block_q, E).
        ho_ref[:, h * Dh:(h + 1) * Dh] = o_h.astype(jnp.bfloat16)

    # Single full-K output projection + bias.
    out = jnp.dot(ho_ref[...], wp_ref[...],
                  preferred_element_type=jnp.float32) + bp_ref[...]
    o_ref[0] = out.astype(o_ref.dtype)


def multi_head_attention(x, wq, wk, wv, wp, bp, *, block_q=None):
    """x: (B, T, E) f32; wq/wk/wv: (H, E, Dh); wp: (E, E) in x@W layout; bp: (E,)."""
    B, T, E = x.shape
    H, _, Dh = wq.shape
    assert H * Dh == E

    if block_q is None:
        block_q = min(T, 128)
        # Keep >= 2 query blocks when B == 1 so v7x's two TensorCores both get
        # work (only when tiles stay sublane-aligned).
        if B == 1 and T // block_q < 2 and T % 16 == 0:
            block_q = min(T // 2, 128)
    assert T % block_q == 0
    nq = T // block_q

    scale = 1.0 / math.sqrt(Dh)

    def head_major(w):             # (H, E, Dh) -> (E, H*Dh), columns head-major
        return jnp.transpose(w, (1, 0, 2)).reshape(E, H * Dh)

    # Pack weights once, outside the kernel, into MXU-friendly bf16 layouts.
    wq_all = (head_major(wq) * scale).astype(jnp.bfloat16)          # (E, H*Dh), pre-scaled
    wkv_all = jnp.concatenate([head_major(wk), head_major(wv)],
                              axis=1).astype(jnp.bfloat16)          # (E, 2*H*Dh)
    wp_b = wp.astype(jnp.bfloat16)                                  # (E, E)
    bp2 = bp.reshape(1, E).astype(jnp.float32)
    x_b = x.astype(jnp.bfloat16)                                    # halve HBM read traffic

    cost = pl.CostEstimate(
        flops=(2 * B * T * E * 3 * H * Dh          # QKV projections (KV once per batch)
               + 4 * B * H * T * T * Dh            # scores + PV
               + 2 * B * T * E * E),               # output projection
        transcendentals=B * H * T * T,             # softmax exp
        bytes_accessed=(2 * B * T * E              # x in (bf16)
                        + 4 * B * T * E            # out (f32)
                        + 2 * E * (3 * H * Dh + E)  # bf16 weights
                        + 4 * E),                  # bias
    )

    # Explicit VMEM budget derived from the actual block sizes (+2x margin).
    bf = 2
    vmem_need = (
        2 * T * E * bf                     # x block (double-buffered)
        + 2 * E * (H * Dh) * bf            # wq
        + 2 * E * (2 * H * Dh) * bf        # wkv
        + 2 * E * E * bf                   # wp
        + 2 * E * 4                        # bias
        + 2 * block_q * E * 4              # out block (double-buffered)
        + T * 2 * H * Dh * bf              # cached K/V scratch
        + block_q * E * bf                 # head-output scratch
        + 8 * block_q * max(T, 128) * 4    # score / softmax intermediates headroom
    )
    vmem_limit = int(min(max(2 * vmem_need, 16 * 1024 * 1024), 64 * 1024 * 1024))

    kernel = partial(mha_kernel, num_heads=H, head_dim=Dh)

    return pl.pallas_call(
        kernel,
        out_shape=jax.ShapeDtypeStruct((B, T, E), jnp.float32),
        grid_spec=pltpu.PrefetchScalarGridSpec(
            num_scalar_prefetch=0,
            grid=(B, nq),
            in_specs=[
                # Full sequence (queries are sliced from it; constant over qi,
                # so it is only DMA'd when the batch index changes).
                pl.BlockSpec((1, T, E), lambda b, qi: (b, 0, 0)),
                # Grid-invariant weights.
                pl.BlockSpec((E, H * Dh), lambda b, qi: (0, 0)),
                pl.BlockSpec((E, 2 * H * Dh), lambda b, qi: (0, 0)),
                pl.BlockSpec((E, E), lambda b, qi: (0, 0)),
                pl.BlockSpec((1, E), lambda b, qi: (0, 0)),
            ],
            out_specs=pl.BlockSpec((1, block_q, E), lambda b, qi: (b, qi, 0)),
            scratch_shapes=[
                pltpu.VMEM((T, 2 * H * Dh), jnp.bfloat16),   # cached K/V projection
                pltpu.VMEM((block_q, E), jnp.bfloat16),      # concatenated head outputs
            ],
        ),
        compiler_params=pltpu.CompilerParams(
            # qi axis is "arbitrary": the K/V scratch is carried across it.
            dimension_semantics=("parallel", "arbitrary"),
            vmem_limit_bytes=vmem_limit),
        cost_estimate=cost,
    )(x_b, wq_all, wkv_all, wp_b, bp2)


def reference(x, wq, wk, wv, wp, bp):
    """Pure-JAX reference (module-faithful) for sanity checking."""
    B, T, E = x.shape
    H, _, Dh = wq.shape
    scale = 1.0 / math.sqrt(Dh)
    causal = jnp.tril(jnp.ones((T, T), dtype=bool))
    outs = []
    for h in range(H):
        q = (x @ wq[h]).astype(jnp.bfloat16)
        k = (x @ wk[h]).astype(jnp.bfloat16)
        v = (x @ wv[h]).astype(jnp.bfloat16)
        s = jnp.einsum("btd,bsd->bts", q, k,
                       preferred_element_type=jnp.float32) * scale
        s = jnp.where(causal[None], s, -jnp.inf)
        p = jax.nn.softmax(s, axis=-1).astype(jnp.bfloat16)
        o = jnp.einsum("bts,bsd->btd", p, v,
                       preferred_element_type=jnp.float32)
        outs.append(o.astype(jnp.bfloat16))
    concat = jnp.concatenate(outs, axis=-1).astype(jnp.float32)
    return concat @ wp + bp


if __name__ == "__main__":
    # small shapes consistent with the module
    B, T = 2, 8                 # batch, seq (block_size)
    H, Dh = 4, 8                # num_heads, head_embd
    E = H * Dh                  # n_embd = 32

    key = jax.random.PRNGKey(0)
    kx, kq, kk, kv, kp, kb = jax.random.split(key, 6)
    x = jax.random.normal(kx, (B, T, E), dtype=jnp.float32)
    wq = 0.05 * jax.random.normal(kq, (H, E, Dh), dtype=jnp.float32)
    wk = 0.05 * jax.random.normal(kk, (H, E, Dh), dtype=jnp.float32)
    wv = 0.05 * jax.random.normal(kv, (H, E, Dh), dtype=jnp.float32)
    wp = 0.05 * jax.random.normal(kp, (E, E), dtype=jnp.float32)
    bp = 0.05 * jax.random.normal(kb, (E,), dtype=jnp.float32)

    out = multi_head_attention(x, wq, wk, wv, wp, bp)
    out = jax.block_until_ready(out)

    ref = reference(x, wq, wk, wv, wp, bp)
    assert out.shape == (B, T, E)
    assert jnp.allclose(out, ref, atol=2e-2, rtol=2e-2)

    print("KERNEL_OK")
</pallas_src>

<mosaic_0001>
module attributes {stable_mosaic.version = 11 : i64} {
  func.func @mha_kernel(%arg0: i32, %arg1: i32, %arg2: memref<1x8x32xbf16, #tpu.memory_space<vmem>>, %arg3: memref<32x32xbf16, #tpu.memory_space<vmem>>, %arg4: memref<32x64xbf16, #tpu.memory_space<vmem>>, %arg5: memref<32x32xbf16, #tpu.memory_space<vmem>>, %arg6: memref<1x32xf32, #tpu.memory_space<vmem>>, %arg7: memref<1x8x32xf32, #tpu.memory_space<vmem>>, %arg8: memref<8x64xbf16, #tpu.memory_space<vmem>>, %arg9: memref<8x32xbf16, #tpu.memory_space<vmem>>) attributes {dimension_semantics = [#tpu.dimension_semantics<parallel>, #tpu.dimension_semantics<arbitrary>], iteration_bounds = array<i64: 2, 1>, scalar_prefetch = 0 : i64, scratch_operands = 2 : i64, tpu.core_type = #tpu.core_type<tc>, window_params = [{transform_indices = @transform_0, window_bounds = array<i64: 1, 8, 32>}, {pipeline_mode = #tpu.pipeline_mode<synchronous>, transform_indices = @transform_1, window_bounds = array<i64: 32, 32>}, {pipeline_mode = #tpu.pipeline_mode<synchronous>, transform_indices = @transform_2, window_bounds = array<i64: 32, 64>}, {pipeline_mode = #tpu.pipeline_mode<synchronous>, transform_indices = @transform_3, window_bounds = array<i64: 32, 32>}, {pipeline_mode = #tpu.pipeline_mode<synchronous>, transform_indices = @transform_4, window_bounds = array<i64: 1, 32>}, {transform_indices = @transform_5, window_bounds = array<i64: 1, 8, 32>}]} {
    %c0_i32 = arith.constant 0 : i32
    %0 = arith.cmpi eq, %arg1, %c0_i32 : i32
    %1 = arith.extui %0 : i1 to i32
    %c0_i32_0 = arith.constant 0 : i32
    %2 = arith.cmpi ne, %1, %c0_i32_0 : i32
    scf.if %2 {
      %c0_51 = arith.constant 0 : index
      %c0_52 = arith.constant 0 : index
      %c0_53 = arith.constant 0 : index
      %105 = vector.load %arg2[%c0_51, %c0_52, %c0_53] : memref<1x8x32xbf16, #tpu.memory_space<vmem>>, vector<1x8x32xbf16>
      %106 = vector.shape_cast %105 : vector<1x8x32xbf16> to vector<8x32xbf16>
      %c0_54 = arith.constant 0 : index
      %c0_55 = arith.constant 0 : index
      %107 = vector.load %arg4[%c0_54, %c0_55] : memref<32x64xbf16, #tpu.memory_space<vmem>>, vector<32x64xbf16>
      %cst_56 = arith.constant dense<0.000000e+00> : vector<8x64xf32>
      %108 = tpu.matmul %106, %107, %cst_56 {dimension_numbers = #tpu.dot_dimension_numbers<[1], [0], [0], [1], [0, 0, 1, 1], [], []>} : vector<8x32xbf16>, vector<32x64xbf16>, vector<8x64xf32> -> vector<8x64xf32>
      %109 = arith.truncf %108 : vector<8x64xf32> to vector<8x64xbf16>
      %c0_57 = arith.constant 0 : index
      %c0_58 = arith.constant 0 : index
      %110 = vector.load %arg8[%c0_57, %c0_58] : memref<8x64xbf16, #tpu.memory_space<vmem>>, vector<8x64xbf16>
      tpu.vector_store %arg8[%c0_57, %c0_58], %109 {strides = array<i32>} : memref<8x64xbf16, #tpu.memory_space<vmem>>, vector<8x64xbf16>,
    } else {
    }
    %c8_i32 = arith.constant 8 : i32
    %3 = arith.muli %arg1, %c8_i32 : i32
    %4 = tpu.assume_multiple %3, 8 : i32
    %c0 = arith.constant 0 : index
    %5 = arith.index_cast %4 : i32 to index
    %c0_1 = arith.constant 0 : index
    %6 = vector.load %arg2[%c0, %5, %c0_1] : memref<1x8x32xbf16, #tpu.memory_space<vmem>>, vector<1x8x32xbf16>
    %7 = vector.shape_cast %6 : vector<1x8x32xbf16> to vector<8x32xbf16>
    %c0_2 = arith.constant 0 : index
    %c0_3 = arith.constant 0 : index
    %8 = vector.load %arg3[%c0_2, %c0_3] : memref<32x32xbf16, #tpu.memory_space<vmem>>, vector<32x32xbf16>
    %cst = arith.constant dense<0.000000e+00> : vector<8x32xf32>
    %9 = tpu.matmul %7, %8, %cst {dimension_numbers = #tpu.dot_dimension_numbers<[1], [0], [0], [1], [0, 0, 1, 1], [], []>} : vector<8x32xbf16>, vector<32x32xbf16>, vector<8x32xf32> -> vector<8x32xf32>
    %10 = arith.truncf %9 : vector<8x32xf32> to vector<8x32xbf16>
    %11 = tpu.iota {dimensions = array<i32: 0>} : vector<8x8xi32>
    %12 = vector.broadcast %4 : i32 to vector<8x8xi32>
    %13 = arith.addi %12, %11 : vector<8x8xi32>
    %14 = tpu.iota {dimensions = array<i32: 1>} : vector<8x8xi32>
    %15 = arith.cmpi sge, %13, %14 : vector<8x8xi32>
    %16 = vector.extract_strided_slice %10 {offsets = [0, 0], sizes = [8, 8], strides = [1, 1]} : vector<8x32xbf16> to vector<8x8xbf16>
    %c0_4 = arith.constant 0 : index
    %c0_5 = arith.constant 0 : index
    %17 = vector.load %arg8[%c0_4, %c0_5] : memref<8x64xbf16, #tpu.memory_space<vmem>>, vector<8x8xbf16>
    %c0_6 = arith.constant 0 : index
    %c32 = arith.constant 32 : index
    %18 = vector.load %arg8[%c0_6, %c32] : memref<8x64xbf16, #tpu.memory_space<vmem>>, vector<8x8xbf16>
    %cst_7 = arith.constant dense<0.000000e+00> : vector<8x8xf32>
    %19 = tpu.matmul %16, %17, %cst_7 {dimension_numbers = #tpu.dot_dimension_numbers<[1], [1], [0], [0], [0, 0, 1, 0], [], []>} : vector<8x8xbf16>, vector<8x8xbf16>, vector<8x8xf32> -> vector<8x8xf32>
    %cst_8 = arith.constant -1.000000e+30 : f32
    %20 = vector.broadcast %cst_8 : f32 to vector<8x8xf32>
    %21 = arith.select %15, %19, %20 : vector<8x8xi1>, vector<8x8xf32>
    %cst_9 = arith.constant dense<0xFF800000> : vector<8xf32>
    %22 = vector.multi_reduction <maximumf>, %21, %cst_9 [1] : vector<8x8xf32> to vector<8xf32>
    %23 = vector.shape_cast %22 : vector<8xf32> to vector<8x1xf32>
    %24 = vector.broadcast %23 : vector<8x1xf32> to vector<8x8xf32>
    %25 = arith.subf %21, %24 : vector<8x8xf32>
    %26 = math.exp %25 : vector<8x8xf32>
    %cst_10 = arith.constant dense<0.000000e+00> : vector<8xf32>
    %27 = vector.multi_reduction <add>, %26, %cst_10 [1] : vector<8x8xf32> to vector<8xf32>
    %28 = vector.shape_cast %27 : vector<8xf32> to vector<8x1xf32>
    %29 = tpu.reciprocal %28 {approx = true} : vector<8x1xf32> -> vector<8x1xf32>
    %30 = vector.broadcast %29 : vector<8x1xf32> to vector<8x8xf32>
    %31 = arith.mulf %26, %30 : vector<8x8xf32>
    %32 = arith.truncf %31 : vector<8x8xf32> to vector<8x8xbf16>
    %cst_11 = arith.constant dense<0.000000e+00> : vector<8x8xf32>
    %33 = tpu.matmul %32, %18, %cst_11 {dimension_numbers = #tpu.dot_dimension_numbers<[1], [0], [0], [1], [0, 0, 1, 1], [], []>} : vector<8x8xbf16>, vector<8x8xbf16>, vector<8x8xf32> -> vector<8x8xf32>
    %34 = arith.truncf %33 : vector<8x8xf32> to vector<8x8xbf16>
    %c0_12 = arith.constant 0 : index
    %c0_13 = arith.constant 0 : index
    %35 = vector.load %arg9[%c0_12, %c0_13] : memref<8x32xbf16, #tpu.memory_space<vmem>>, vector<8x8xbf16>
    tpu.vector_store %arg9[%c0_12, %c0_13], %34 {strides = array<i32>} : memref<8x32xbf16, #tpu.memory_space<vmem>>, vector<8x8xbf16>,
    %36 = vector.extract_strided_slice %10 {offsets = [0, 8], sizes = [8, 8], strides = [1, 1]} : vector<8x32xbf16> to vector<8x8xbf16>
    %c0_14 = arith.constant 0 : index
    %c8 = arith.constant 8 : index
    %37 = vector.load %arg8[%c0_14, %c8] : memref<8x64xbf16, #tpu.memory_space<vmem>>, vector<8x8xbf16>
    %c0_15 = arith.constant 0 : index
    %c40 = arith.constant 40 : index
    %38 = vector.load %arg8[%c0_15, %c40] : memref<8x64xbf16, #tpu.memory_space<vmem>>, vector<8x8xbf16>
    %cst_16 = arith.constant dense<0.000000e+00> : vector<8x8xf32>
    %39 = tpu.matmul %36, %37, %cst_16 {dimension_numbers = #tpu.dot_dimension_numbers<[1], [1], [0], [0], [0, 0, 1, 0], [], []>} : vector<8x8xbf16>, vector<8x8xbf16>, vector<8x8xf32> -> vector<8x8xf32>
    %cst_17 = arith.constant -1.000000e+30 : f32
    %40 = vector.broadcast %cst_17 : f32 to vector<8x8xf32>
    %41 = arith.select %15, %39, %40 : vector<8x8xi1>, vector<8x8xf32>
    %cst_18 = arith.constant dense<0xFF800000> : vector<8xf32>
    %42 = vector.multi_reduction <maximumf>, %41, %cst_18 [1] : vector<8x8xf32> to vector<8xf32>
    %43 = vector.shape_cast %42 : vector<8xf32> to vector<8x1xf32>
    %44 = vector.broadcast %43 : vector<8x1xf32> to vector<8x8xf32>
    %45 = arith.subf %41, %44 : vector<8x8xf32>
    %46 = math.exp %45 : vector<8x8xf32>
    %cst_19 = arith.constant dense<0.000000e+00> : vector<8xf32>
    %47 = vector.multi_reduction <add>, %46, %cst_19 [1] : vector<8x8xf32> to vector<8xf32>
    %48 = vector.shape_cast %47 : vector<8xf32> to vector<8x1xf32>
    %49 = tpu.reciprocal %48 {approx = true} : vector<8x1xf32> -> vector<8x1xf32>
    %50 = vector.broadcast %49 : vector<8x1xf32> to vector<8x8xf32>
    %51 = arith.mulf %46, %50 : vector<8x8xf32>
    %52 = arith.truncf %51 : vector<8x8xf32> to vector<8x8xbf16>
    %cst_20 = arith.constant dense<0.000000e+00> : vector<8x8xf32>
    %53 = tpu.matmul %52, %38, %cst_20 {dimension_numbers = #tpu.dot_dimension_numbers<[1], [0], [0], [1], [0, 0, 1, 1], [], []>} : vector<8x8xbf16>, vector<8x8xbf16>, vector<8x8xf32> -> vector<8x8xf32>
    %54 = arith.truncf %53 : vector<8x8xf32> to vector<8x8xbf16>
    %c0_21 = arith.constant 0 : index
    %c8_22 = arith.constant 8 : index
    %55 = vector.load %arg9[%c0_21, %c8_22] : memref<8x32xbf16, #tpu.memory_space<vmem>>, vector<8x8xbf16>
    tpu.vector_store %arg9[%c0_21, %c8_22], %54 {strides = array<i32>} : memref<8x32xbf16, #tpu.memory_space<vmem>>, vector<8x8xbf16>,
    %56 = vector.extract_strided_slice %10 {offsets = [0, 16], sizes = [8, 8], strides = [1, 1]} : vector<8x32xbf16> to vector<8x8xbf16>
    %c0_23 = arith.constant 0 : index
    %c16 = arith.constant 16 : index
    %57 = vector.load %arg8[%c0_23, %c16] : memref<8x64xbf16, #tpu.memory_space<vmem>>, vector<8x8xbf16>
    %c0_24 = arith.constant 0 : index
    %c48 = arith.constant 48 : index
    %58 = vector.load %arg8[%c0_24, %c48] : memref<8x64xbf16, #tpu.memory_space<vmem>>, vector<8x8xbf16>
    %cst_25 = arith.constant dense<0.000000e+00> : vector<8x8xf32>
    %59 = tpu.matmul %56, %57, %cst_25 {dimension_numbers = #tpu.dot_dimension_numbers<[1], [1], [0], [0], [0, 0, 1, 0], [], []>} : vector<8x8xbf16>, vector<8x8xbf16>, vector<8x8xf32> -> vector<8x8xf32>
    %cst_26 = arith.constant -1.000000e+30 : f32
    %60 = vector.broadcast %cst_26 : f32 to vector<8x8xf32>
    %61 = arith.select %15, %59, %60 : vector<8x8xi1>, vector<8x8xf32>
    %cst_27 = arith.constant dense<0xFF800000> : vector<8xf32>
    %62 = vector.multi_reduction <maximumf>, %61, %cst_27 [1] : vector<8x8xf32> to vector<8xf32>
    %63 = vector.shape_cast %62 : vector<8xf32> to vector<8x1xf32>
    %64 = vector.broadcast %63 : vector<8x1xf32> to vector<8x8xf32>
    %65 = arith.subf %61, %64 : vector<8x8xf32>
    %66 = math.exp %65 : vector<8x8xf32>
    %cst_28 = arith.constant dense<0.000000e+00> : vector<8xf32>
    %67 = vector.multi_reduction <add>, %66, %cst_28 [1] : vector<8x8xf32> to vector<8xf32>
    %68 = vector.shape_cast %67 : vector<8xf32> to vector<8x1xf32>
    %69 = tpu.reciprocal %68 {approx = true} : vector<8x1xf32> -> vector<8x1xf32>
    %70 = vector.broadcast %69 : vector<8x1xf32> to vector<8x8xf32>
    %71 = arith.mulf %66, %70 : vector<8x8xf32>
    %72 = arith.truncf %71 : vector<8x8xf32> to vector<8x8xbf16>
    %cst_29 = arith.constant dense<0.000000e+00> : vector<8x8xf32>
    %73 = tpu.matmul %72, %58, %cst_29 {dimension_numbers = #tpu.dot_dimension_numbers<[1], [0], [0], [1], [0, 0, 1, 1], [], []>} : vector<8x8xbf16>, vector<8x8xbf16>, vector<8x8xf32> -> vector<8x8xf32>
    %74 = arith.truncf %73 : vector<8x8xf32> to vector<8x8xbf16>
    %c0_30 = arith.constant 0 : index
    %c16_31 = arith.constant 16 : index
    %75 = vector.load %arg9[%c0_30, %c16_31] : memref<8x32xbf16, #tpu.memory_space<vmem>>, vector<8x8xbf16>
    tpu.vector_store %arg9[%c0_30, %c16_31], %74 {strides = array<i32>} : memref<8x32xbf16, #tpu.memory_space<vmem>>, vector<8x8xbf16>,
    %76 = vector.extract_strided_slice %10 {offsets = [0, 24], sizes = [8, 8], strides = [1, 1]} : vector<8x32xbf16> to vector<8x8xbf16>
    %c0_32 = arith.constant 0 : index
    %c24 = arith.constant 24 : index
    %77 = vector.load %arg8[%c0_32, %c24] : memref<8x64xbf16, #tpu.memory_space<vmem>>, vector<8x8xbf16>
    %c0_33 = arith.constant 0 : index
    %c56 = arith.constant 56 : index
    %78 = vector.load %arg8[%c0_33, %c56] : memref<8x64xbf16, #tpu.memory_space<vmem>>, vector<8x8xbf16>
    %cst_34 = arith.constant dense<0.000000e+00> : vector<8x8xf32>
    %79 = tpu.matmul %76, %77, %cst_34 {dimension_numbers = #tpu.dot_dimension_numbers<[1], [1], [0], [0], [0, 0, 1, 0], [], []>} : vector<8x8xbf16>, vector<8x8xbf16>, vector<8x8xf32> -> vector<8x8xf32>
    %cst_35 = arith.constant -1.000000e+30 : f32
    %80 = vector.broadcast %cst_35 : f32 to vector<8x8xf32>
    %81 = arith.select %15, %79, %80 : vector<8x8xi1>, vector<8x8xf32>
    %cst_36 = arith.constant dense<0xFF800000> : vector<8xf32>
    %82 = vector.multi_reduction <maximumf>, %81, %cst_36 [1] : vector<8x8xf32> to vector<8xf32>
    %83 = vector.shape_cast %82 : vector<8xf32> to vector<8x1xf32>
    %84 = vector.broadcast %83 : vector<8x1xf32> to vector<8x8xf32>
    %85 = arith.subf %81, %84 : vector<8x8xf32>
    %86 = math.exp %85 : vector<8x8xf32>
    %cst_37 = arith.constant dense<0.000000e+00> : vector<8xf32>
    %87 = vector.multi_reduction <add>, %86, %cst_37 [1] : vector<8x8xf32> to vector<8xf32>
    %88 = vector.shape_cast %87 : vector<8xf32> to vector<8x1xf32>
    %89 = tpu.reciprocal %88 {approx = true} : vector<8x1xf32> -> vector<8x1xf32>
    %90 = vector.broadcast %89 : vector<8x1xf32> to vector<8x8xf32>
    %91 = arith.mulf %86, %90 : vector<8x8xf32>
    %92 = arith.truncf %91 : vector<8x8xf32> to vector<8x8xbf16>
    %cst_38 = arith.constant dense<0.000000e+00> : vector<8x8xf32>
    %93 = tpu.matmul %92, %78, %cst_38 {dimension_numbers = #tpu.dot_dimension_numbers<[1], [0], [0], [1], [0, 0, 1, 1], [], []>} : vector<8x8xbf16>, vector<8x8xbf16>, vector<8x8xf32> -> vector<8x8xf32>
    %94 = arith.truncf %93 : vector<8x8xf32> to vector<8x8xbf16>
    %c0_39 = arith.constant 0 : index
    %c24_40 = arith.constant 24 : index
    %95 = vector.load %arg9[%c0_39, %c24_40] : memref<8x32xbf16, #tpu.memory_space<vmem>>, vector<8x8xbf16>
    tpu.vector_store %arg9[%c0_39, %c24_40], %94 {strides = array<i32>} : memref<8x32xbf16, #tpu.memory_space<vmem>>, vector<8x8xbf16>,
    %c0_41 = arith.constant 0 : index
    %c0_42 = arith.constant 0 : index
    %96 = vector.load %arg9[%c0_41, %c0_42] : memref<8x32xbf16, #tpu.memory_space<vmem>>, vector<8x32xbf16>
    %c0_43 = arith.constant 0 : index
    %c0_44 = arith.constant 0 : index
    %97 = vector.load %arg5[%c0_43, %c0_44] : memref<32x32xbf16, #tpu.memory_space<vmem>>, vector<32x32xbf16>
    %cst_45 = arith.constant dense<0.000000e+00> : vector<8x32xf32>
    %98 = tpu.matmul %96, %97, %cst_45 {dimension_numbers = #tpu.dot_dimension_numbers<[1], [0], [0], [1], [0, 0, 1, 1], [], []>} : vector<8x32xbf16>, vector<32x32xbf16>, vector<8x32xf32> -> vector<8x32xf32>
    %c0_46 = arith.constant 0 : index
    %c0_47 = arith.constant 0 : index
    %99 = vector.load %arg6[%c0_46, %c0_47] : memref<1x32xf32, #tpu.memory_space<vmem>>, vector<1x32xf32>
    %100 = vector.broadcast %99 : vector<1x32xf32> to vector<8x32xf32>
    %101 = arith.addf %98, %100 : vector<8x32xf32>
    %c0_48 = arith.constant 0 : index
    %c0_49 = arith.constant 0 : index
    %c0_50 = arith.constant 0 : index
    %102 = vector.load %arg7[%c0_48, %c0_49, %c0_50] : memref<1x8x32xf32, #tpu.memory_space<vmem>>, vector<1x8x32xf32>
    %103 = vector.shape_cast %102 : vector<1x8x32xf32> to vector<8x32xf32>
    %104 = vector.shape_cast %101 : vector<8x32xf32> to vector<1x8x32xf32>
    tpu.vector_store %arg7[%c0_48, %c0_49, %c0_50], %104 {strides = array<i32>} : memref<1x8x32xf32, #tpu.memory_space<vmem>>, vector<1x8x32xf32>,
    return
  }
  func.func @transform_0(%arg0: i32, %arg1: i32) -> (i32, i32, i32) {
    %c0_i32 = arith.constant 0 : i32
    %c0_i32_0 = arith.constant 0 : i32
    %c0_i32_1 = arith.constant 0 : i32
    return %arg0, %c0_i32, %c0_i32_0 : i32, i32, i32
  }
  func.func @transform_1(%arg0: i32, %arg1: i32) -> (i32, i32) {
    %c0_i32 = arith.constant 0 : i32
    %c0_i32_0 = arith.constant 0 : i32
    %c0_i32_1 = arith.constant 0 : i32
    return %c0_i32, %c0_i32_0 : i32, i32
  }
  func.func @transform_2(%arg0: i32, %arg1: i32) -> (i32, i32) {
    %c0_i32 = arith.constant 0 : i32
    %c0_i32_0 = arith.constant 0 : i32
    %c0_i32_1 = arith.constant 0 : i32
    return %c0_i32, %c0_i32_0 : i32, i32
  }
  func.func @transform_3(%arg0: i32, %arg1: i32) -> (i32, i32) {
    %c0_i32 = arith.constant 0 : i32
    %c0_i32_0 = arith.constant 0 : i32
    %c0_i32_1 = arith.constant 0 : i32
    return %c0_i32, %c0_i32_0 : i32, i32
  }
  func.func @transform_4(%arg0: i32, %arg1: i32) -> (i32, i32) {
    %c0_i32 = arith.constant 0 : i32
    %c0_i32_0 = arith.constant 0 : i32
    %c0_i32_1 = arith.constant 0 : i32
    return %c0_i32, %c0_i32_0 : i32, i32
  }
  func.func @transform_5(%arg0: i32, %arg1: i32) -> (i32, i32, i32) {
    %c0_i32 = arith.constant 0 : i32
    %c0_i32_0 = arith.constant 0 : i32
    return %arg0, %arg1, %c0_i32 : i32, i32, i32
  }
}

</mosaic_0001>

<llo_original>
// kernel: tpu_custom_call.1
$region0: #{tpu_custom_call.1}
  #allocation0 [shape = 'u32[]', space=smem, size = 0x4, offset = 0x4, fixed_abs, tag = 'smem constant byte address 0x4 - core index']
  #allocation1 [shape = 'u32[144,128]{1,0:T(1,128)}', space=vmem, size = 0x12000, scoped, tag = 'internal scratch']
  #allocation2 [shape = 'bf16[8,64]{1,0:T(8,128)(2,1)}', space=vmem, size = 0x800, scoped, tag = 'scratch operand']
  #allocation3 [shape = 'bf16[8,32]{1,0:T(8,128)(2,1)}', space=vmem, size = 0x800, scoped, tag = 'scratch operand']
  %s0 = inlined_call_operand.hbm [shape: bf16[2,8,32], index: 0, kind: input, shape index: {}]
  %s1 = inlined_call_operand.hbm [shape: bf16[32,32], index: 1, kind: input, shape index: {}]
  %s2 = inlined_call_operand.hbm [shape: bf16[32,64], index: 2, kind: input, shape index: {}]
  %s3 = inlined_call_operand.hbm [shape: bf16[32,32], index: 3, kind: input, shape index: {}]
  %s4 = inlined_call_operand.vmem [shape: f32[1,32], index: 4, kind: input, shape index: {}]
  %s5 = inlined_call_operand.hbm [shape: f32[2,8,32], index: 5, kind: output, shape index: {}]
  %s6 = sld [smem:[#allocation0]]
  $region73: #{tpu_custom_call.1} parent=0
    _
  %s8 = ssub.s32 1, %s6
  %s9 = scalar_select 0, %s8, %s6
  $region1: #{tpu_custom_call.1} parent=0
    #allocation4 [shape = 'u8[4096]{0}', space=vmem, size = 0x1000, scoped, tag = 'input window, operand 0']
    #allocation5 [shape = 's32[2]{0}', space=sflag, size = 0x8, scoped, tag = 'scoped memory for tpu_custom_call.1']
    #allocation6 [shape = 's32[2]{0}', space=sflag, size = 0x8, scoped, tag = 'scoped memory for tpu_custom_call.1']
    #allocation7 [shape = 'u8[8192]{0}', space=vmem, size = 0x2000, scoped, tag = 'input window, operand 1, single buffered']
    #allocation8 [shape = 's32[1]{0}', space=sflag, size = 0x4, scoped, tag = 'scoped memory for tpu_custom_call.1']
    #allocation9 [shape = 'u8[8192]{0}', space=vmem, size = 0x2000, scoped, tag = 'input window, operand 2, single buffered']
    #allocation10 [shape = 'u8[8192]{0}', space=vmem, size = 0x2000, scoped, tag = 'input window, operand 3, single buffered']
    #allocation11 [shape = 's32[1]{0}', space=sflag, size = 0x4, scoped, tag = 'scoped memory for tpu_custom_call.1']
    #allocation12 [shape = 'u8[8192]{0}', space=vmem, size = 0x2000, scoped, tag = 'output window, operand 0']
    %10 = vsyncpa [#allocation5], 0
    %s11 = scalar_lea.sflag [#allocation5], 1
    %12 = vsyncpa %s11, 0
    %13 = vsyncpa [#allocation8], 0
    %14 = vsyncpa [#allocation11], 0
    %15 = vsyncpa [#allocation6], 0
    %s16 = scalar_lea.sflag [#allocation6], 1
    %17 = vsyncpa %s16, 0
    loop: start=0, step=1, limit=4
    $region2: #{tpu_custom_call.1} parent=1 // loop_pre_header
      _
    $region3: #{tpu_custom_call.1} parent=1 // loop_header
      %s19 = sphi 0, %s23
      %p20 = scmp.ge.s32.totalorder %s19, 4
      %s26 = sphi 0, %s38
      %s27 = sphi 0, %s34
      %s28 = sphi 0, %s26
      %s29 = sphi 0, %s27
      %s30 = sphi 0, %s28
      %s31 = sphi 0, %s29
      %s41 = sphi 0, %s43
      %s44 = sphi 0, %s41
      %s45 = sphi 0, %s44
      %s61 = sphi 0, %s45
      %s65 = sphi 0, %s65
      %s67 = sphi 0, %s65
      %s68 = sphi 0, %s67
      %s82 = sphi 0, %s68
      %s86 = sphi 0, %s86
      %s88 = sphi 0, %s86
      %s89 = sphi 0, %s88
      %s103 = sphi 0, %s89
      %s107 = sphi 0, %s107
      %s109 = sphi 0, %s107
      %s110 = sphi 0, %s109
      %s124 = sphi 0, %s110
      %s128 = sphi 0, %s128
      %s130 = sphi 0, %s128
      %s131 = sphi 0, %s130
      %s145 = sphi 0, %s131
      %s153 = sphi 0, %s155
      %s156 = sphi 0, %s153
      %s157 = sphi 0, %s156
      %s173 = sphi 0, %s157
    $region4: #{tpu_custom_call.1} parent=1 // loop_header_branch
      %22 = sbr.rel (%p20) target = $region8
    $region5: #{tpu_custom_call.1} parent=1 // loop_body
      %s24 = ssub.s32 %s19, 1
      %s25 = ssub.s32 %s19, 2
      %s32 = sadd.s32 1, %s27
      %p33 = scmp.ge.s32.totalorder %s32, 1
      %s34 = scalar_select %p33, 0, %s32
      %s35 = sadd.s32 1, %s26
      %s36 = scalar_select %p33, %s35, %s26
      %p37 = scmp.ge.s32.totalorder %s36, 2
      %s38 = scalar_select %p37, 0, %s36
      %s39 = ssub.s32 %s26, %s38
      %p40 = scmp.eq.s32.totalorder %s39, 0
      %s42 = sadd.s32 %s41, 1
      %s43 = scalar_select %p40, %s41, %s42
      %p46 = pneg %p40
      %p47 = scmp.eq.s32.totalorder %s19, 1
      %p48 = por %p46, %p47
      %p49 = scmp.ne.s32.totalorder %s41, %s44
      %p50 = scmp.eq.s32.totalorder %s19, 0
      %p51 = por %p49, %p50
      %p52 = scmp.ne.s32.totalorder %s41, %s44
      %p53 = scmp.eq.s32.totalorder %s24, 1
      %p54 = por %p52, %p53
      %p55 = scmp.ne.s32.totalorder %s44, %s45
      %p56 = scmp.eq.s32.totalorder %s24, 0
      %p57 = por %p55, %p56
      %p58 = scmp.ne.s32.totalorder %s44, %s45
      %p59 = scmp.eq.s32.totalorder %s25, 1
      %p60 = por %p58, %p59
      %p62 = scmp.ne.s32.totalorder %s45, %s61
      %p63 = scmp.eq.s32.totalorder %s25, 0
      %p64 = por %p62, %p63
      %s66 = sadd.s32 %s65, 1
      %p69 = scmp.eq.s32.totalorder %s19, 1
      %p70 = scmp.ne.s32.totalorder %s65, %s67
      %p71 = scmp.eq.s32.totalorder %s19, 0
      %p72 = por %p70, %p71
      %p73 = scmp.ne.s32.totalorder %s65, %s67
      %p74 = scmp.eq.s32.totalorder %s24, 1
      %p75 = por %p73, %p74
      %p76 = scmp.ne.s32.totalorder %s67, %s68
      %p77 = scmp.eq.s32.totalorder %s24, 0
      %p78 = por %p76, %p77
      %p79 = scmp.ne.s32.totalorder %s67, %s68
      %p80 = scmp.eq.s32.totalorder %s25, 1
      %p81 = por %p79, %p80
      %p83 = scmp.ne.s32.totalorder %s68, %s82
      %p84 = scmp.eq.s32.totalorder %s25, 0
      %p85 = por %p83, %p84
      %s87 = sadd.s32 %s86, 1
      %p90 = scmp.eq.s32.totalorder %s19, 1
      %p91 = scmp.ne.s32.totalorder %s86, %s88
      %p92 = scmp.eq.s32.totalorder %s19, 0
      %p93 = por %p91, %p92
      %p94 = scmp.ne.s32.totalorder %s86, %s88
      %p95 = scmp.eq.s32.totalorder %s24, 1
      %p96 = por %p94, %p95
      %p97 = scmp.ne.s32.totalorder %s88, %s89
      %p98 = scmp.eq.s32.totalorder %s24, 0
      %p99 = por %p97, %p98
      %p100 = scmp.ne.s32.totalorder %s88, %s89
      %p101 = scmp.eq.s32.totalorder %s25, 1
      %p102 = por %p100, %p101
      %p104 = scmp.ne.s32.totalorder %s89, %s103
      %p105 = scmp.eq.s32.totalorder %s25, 0
      %p106 = por %p104, %p105
      %s108 = sadd.s32 %s107, 1
      %p111 = scmp.eq.s32.totalorder %s19, 1
      %p112 = scmp.ne.s32.totalorder %s107, %s109
      %p113 = scmp.eq.s32.totalorder %s19, 0
      %p114 = por %p112, %p113
      %p115 = scmp.ne.s32.totalorder %s107, %s109
      %p116 = scmp.eq.s32.totalorder %s24, 1
      %p117 = por %p115, %p116
      %p118 = scmp.ne.s32.totalorder %s109, %s110
      %p119 = scmp.eq.s32.totalorder %s24, 0
      %p120 = por %p118, %p119
      %p121 = scmp.ne.s32.totalorder %s109, %s110
      %p122 = scmp.eq.s32.totalorder %s25, 1
      %p123 = por %p121, %p122
      %p125 = scmp.ne.s32.totalorder %s110, %s124
      %p126 = scmp.eq.s32.totalorder %s25, 0
      %p127 = por %p125, %p126
      %s129 = sadd.s32 %s128, 1
      %p132 = scmp.eq.s32.totalorder %s19, 1
      %p133 = scmp.ne.s32.totalorder %s128, %s130
      %p134 = scmp.eq.s32.totalorder %s19, 0
      %p135 = por %p133, %p134
      %p136 = scmp.ne.s32.totalorder %s128, %s130
      %p137 = scmp.eq.s32.totalorder %s24, 1
      %p138 = por %p136, %p137
      %p139 = scmp.ne.s32.totalorder %s130, %s131
      %p140 = scmp.eq.s32.totalorder %s24, 0
      %p141 = por %p139, %p140
      %p142 = scmp.ne.s32.totalorder %s130, %s131
      %p143 = scmp.eq.s32.totalorder %s25, 1
      %p144 = por %p142, %p143
      %p146 = scmp.ne.s32.totalorder %s131, %s145
      %p147 = scmp.eq.s32.totalorder %s25, 0
      %p148 = por %p146, %p147
      %s149 = ssub.s32 %s26, %s38
      %s150 = ssub.s32 %s27, %s34
      %s151 = sor.u32 %s149, %s150
      %p152 = scmp.eq.s32.totalorder %s151, 0
      %s154 = sadd.s32 %s153, 1
      %s155 = scalar_select %p152, %s153, %s154
      %p158 = pneg %p152
      %p159 = scmp.eq.s32.totalorder %s19, 1
      %p160 = por %p158, %p159
      %p161 = scmp.ne.s32.totalorder %s153, %s156
      %p162 = scmp.eq.s32.totalorder %s19, 0
      %p163 = por %p161, %p162
      %p164 = scmp.ne.s32.totalorder %s153, %s156
      %p165 = scmp.eq.s32.totalorder %s24, 1
      %p166 = por %p164, %p165
      %p167 = scmp.ne.s32.totalorder %s156, %s157
      %p168 = scmp.eq.s32.totalorder %s24, 0
      %p169 = por %p167, %p168
      %p170 = scmp.ne.s32.totalorder %s156, %s157
      %p171 = scmp.eq.s32.totalorder %s25, 1
      %p172 = por %p170, %p171
      %p174 = scmp.ne.s32.totalorder %s157, %s173
      %p175 = scmp.eq.s32.totalorder %s25, 0
      %p176 = por %p174, %p175
      %p177 = scmp.le.s32.totalorder 1, %s19
      %p178 = scmp.lt.s32.totalorder %s19, 3
      %p179 = pnand %p177, %p178
      %p180 = pneg %p179
      // Predicated region
      $region9: #{tpu_custom_call.1} parent=5 // pred_check
        _
      $region10: #{tpu_custom_call.1} parent=5 // pred_check_branch
        %182 = sbr.rel (%p179) target = $region12
      $region11: #{tpu_custom_call.1} parent=5 // pred_region
        %s183 = ssub.s32 %s19, 1
        // Predicated region
        $region13: #{tpu_custom_call.1} parent=11 // pred_check
          %p184 = pneg %p78
        $region14: #{tpu_custom_call.1} parent=11 // pred_check_branch
          %186 = sbr.rel (%p184) target = $region16
        $region15: #{tpu_custom_call.1} parent=11 // pred_region
          %s188 = ssub.s32 256, 256
          %189 = vsyncadd [#allocation8], %s188
          %s190 = sshll.u32 [#allocation7], 4
          %s191 = int_to_ptr.vmem [resolvable:$true] %s190
          %196 = dma.hbm_to_vmem [thread:$0]  %s1, 256, %s191, [#allocation8], 64, 64, 4
        $region16: #{tpu_custom_call.1} parent=11 // pred_fallthru
          _
        // Predicated region
        $region17: #{tpu_custom_call.1} parent=11 // pred_check
          %p197 = pneg %p99
        $region18: #{tpu_custom_call.1} parent=11 // pred_check_branch
          %199 = sbr.rel (%p197) target = $region20
        $region19: #{tpu_custom_call.1} parent=11 // pred_region
          %s201 = ssub.s32 256, 256
          %202 = vsyncadd [#allocation8], %s201
          %s203 = sshll.u32 [#allocation9], 4
          %s204 = int_to_ptr.vmem [resolvable:$true] %s203
          %209 = dma.hbm_to_vmem [thread:$0]  %s2, 256, %s204, [#allocation8], 64, 64, 4
        $region20: #{tpu_custom_call.1} parent=11 // pred_fallthru
          _
        // Predicated region
        $region21: #{tpu_custom_call.1} parent=11 // pred_check
          %p210 = pneg %p120
        $region22: #{tpu_custom_call.1} parent=11 // pred_check_branch
          %212 = sbr.rel (%p210) target = $region24
        $region23: #{tpu_custom_call.1} parent=11 // pred_region
          %s214 = ssub.s32 256, 256
          %215 = vsyncadd [#allocation11], %s214
          %s216 = sshll.u32 [#allocation10], 4
          %s217 = int_to_ptr.vmem [resolvable:$true] %s216
          %222 = dma.hbm_to_vmem [thread:$0]  %s3, 256, %s217, [#allocation11], 64, 64, 4
        $region24: #{tpu_custom_call.1} parent=11 // pred_fallthru
          _
        // Predicated region
        $region25: #{tpu_custom_call.1} parent=11 // pred_check
          %p223 = pneg %p141
        $region26: #{tpu_custom_call.1} parent=11 // pred_check_branch
          %225 = sbr.rel (%p223) target = $region28
        $region27: #{tpu_custom_call.1} parent=11 // pred_region
          _
        $region28: #{tpu_custom_call.1} parent=11 // pred_fallthru
          _
      $region12: #{tpu_custom_call.1} parent=5 // pred_fallthru
        _
      %p226 = scmp.lt.s32.totalorder %s19, 2
      // Predicated region
      $region29: #{tpu_custom_call.1} parent=5 // pred_check
        %p227 = pneg %p226
      $region30: #{tpu_custom_call.1} parent=5 // pred_check_branch
        %229 = sbr.rel (%p227) target = $region32
      $region31: #{tpu_custom_call.1} parent=5 // pred_region
        // Predicated region
        $region33: #{tpu_custom_call.1} parent=31 // pred_check
          %p230 = pneg %p51
        $region34: #{tpu_custom_call.1} parent=31 // pred_check_branch
          %232 = sbr.rel (%p230) target = $region36
        $region35: #{tpu_custom_call.1} parent=31 // pred_region
          %s233 = sand.u32 %s41, 1
          %s234 = scalar_lea.sflag [#allocation5], %s233
          %s235 = sand.u32 %s41, 1
          %s236 = smul.addr %s235, 4
          %s237 = scalar_lea.vmem [#allocation4], %s236
          %s239 = ssub.s32 64, 64
          %240 = vsyncadd %s234, %s239
          %s241 = smul.addr %s26, 64
          %s242 = scalar_lea.hbm %s0, %s241
          %s244 = sshll.u32 %s237, 4
          %s245 = int_to_ptr.vmem [resolvable:$true] %s244
          %247 = dma.hbm_to_vmem [thread:$0]  %s242, 64, %s245, %s234
        $region36: #{tpu_custom_call.1} parent=31 // pred_fallthru
          _
      $region32: #{tpu_custom_call.1} parent=5 // pred_fallthru
        _
      %p248 = scmp.le.s32.totalorder 1, %s19
      %p249 = scmp.lt.s32.totalorder %s19, 3
      %p250 = pnand %p248, %p249
      %p251 = pneg %p250
      // Predicated region
      $region37: #{tpu_custom_call.1} parent=5 // pred_check
        _
      $region38: #{tpu_custom_call.1} parent=5 // pred_check_branch
        %253 = sbr.rel (%p250) target = $region40
      $region39: #{tpu_custom_call.1} parent=5 // pred_region
        %s254 = ssub.s32 %s19, 1
        %s255 = sand.u32 %s44, 1
        %s256 = scalar_lea.sflag [#allocation5], %s255
        %s257 = sand.u32 %s44, 1
        %s258 = smul.addr %s257, 4
        %s259 = scalar_lea.vmem [#allocation4], %s258
        // Predicated region
        $region41: #{tpu_custom_call.1} parent=39 // pred_check
          %p260 = pneg %p57
        $region42: #{tpu_custom_call.1} parent=39 // pred_check_branch
          %262 = sbr.rel (%p260) target = $region44
        $region43: #{tpu_custom_call.1} parent=39 // pred_region
          %263 = dma.done %s256, 64
        $region44: #{tpu_custom_call.1} parent=39 // pred_fallthru
          _
        // Predicated region
        $region45: #{tpu_custom_call.1} parent=39 // pred_check
          %p264 = pneg %p78
        $region46: #{tpu_custom_call.1} parent=39 // pred_check_branch
          %266 = sbr.rel (%p264) target = $region48
        $region47: #{tpu_custom_call.1} parent=39 // pred_region
          %267 = dma.done [#allocation8], 256
        $region48: #{tpu_custom_call.1} parent=39 // pred_fallthru
          _
        // Predicated region
        $region49: #{tpu_custom_call.1} parent=39 // pred_check
          %p268 = pneg %p99
        $region50: #{tpu_custom_call.1} parent=39 // pred_check_branch
          %270 = sbr.rel (%p268) target = $region52
        $region51: #{tpu_custom_call.1} parent=39 // pred_region
          %271 = dma.done [#allocation8], 256
        $region52: #{tpu_custom_call.1} parent=39 // pred_fallthru
          _
        // Predicated region
        $region53: #{tpu_custom_call.1} parent=39 // pred_check
          %p272 = pneg %p120
        $region54: #{tpu_custom_call.1} parent=39 // pred_check_branch
          %274 = sbr.rel (%p272) target = $region56
        $region55: #{tpu_custom_call.1} parent=39 // pred_region
          %275 = dma.done [#allocation11], 256
        $region56: #{tpu_custom_call.1} parent=39 // pred_fallthru
          _
        %s276 = sand.u32 %s44, 1
        %s277 = scalar_lea.sflag [#allocation5], %s276
        %s278 = sand.u32 %s44, 1
        %s279 = smul.addr %s278, 4
        %s280 = scalar_lea.vmem [#allocation4], %s279
        %p281 = pneg %p57
        %p282 = pneg %p54
        %p283 = pneg %p78
        %p284 = pneg %p75
        %p285 = pneg %p99
        %p286 = pneg %p96
        %p287 = pneg %p120
        %p288 = pneg %p117
        %p289 = pneg %p141
        %p290 = pneg %p138
        %p291 = pneg %p169
        %p292 = pneg %p166
        %s293 = sand.u32 %s156, 1
        %s294 = scalar_lea.sflag [#allocation6], %s293
        %s295 = sand.u32 %s156, 1
        %s296 = smul.addr %s295, 8
        %s297 = scalar_lea.vmem [#allocation12], %s296
        %p299 = scmp.eq.s32.totalorder %s29, 0
        // Predicated region
        $region57: #{tpu_custom_call.1} parent=39 // pred_check
          %p300 = pneg %p299
        $region58: #{tpu_custom_call.1} parent=39 // pred_check_branch
          %302 = sbr.rel (%p300) target = $region60
        $region59: #{tpu_custom_call.1} parent=39 // pred_region
          %v303 = vld [vmem:[%s259] sm:$0xf]
          %v304 = vld [vmem:[#allocation9] sm:$0xf]
          %v305 = vld [vmem:[#allocation9 + $0x4] sm:$0xf]
          %v306 = vld [vmem:[#allocation9 + $0x8] sm:$0xf]
          %v307 = vld [vmem:[#allocation9 + $0xc] sm:$0xf]
          %v312 = vunpack.c.l.b16 %v304
          %v313 = vunpack.c.l.b16 %v305
          %v314 = vunpack.c.l.b16 %v306
          %v315 = vunpack.c.l.b16 %v307
          %v316 = vpack.c.b16 %v313, %v312
          %v317 = vpack.c.b16 %v315, %v314
          %vm320 = vcmask 261120
          %v322 = vsel %vm320, %v303, 0
          %324 = vmatprep.subr.bf16.mxu0 0
          %325 = vmatpush1.bf16.msra.mxu0 %v316
          %326 = vmatprep.subr.bf16.mxu0 0
          %327 = vmatpush1.bf16.msra.mxu0 %v317
          %328 = vmatprep.subr.bf16.mxu0 0
          %329 = vmatpush1.bf16.msra.mxu0 0
          %330 = vmatprep.subr.bf16.mxu0 0
          %331 = vmatpush1.bf16.msra.mxu0 0
          %332 = vmatprep.subr.bf16.mxu0 0
          %333 = vmatpush1.bf16.msra.mxu0 0
          %334 = vmatprep.subr.bf16.mxu0 0
          %335 = vmatpush1.bf16.msra.mxu0 0
          %336 = vmatprep.subr.bf16.mxu0 0
          %337 = vmatpush1.bf16.msra.mxu0 0
          %338 = vmatprep.subr.bf16.mxu0 0
          %339 = vmatpush1.bf16.msra.mxu0 0
          %340 = vmatprep.subr.bf16.mxu0 0
          %341 = vmatpush1.bf16.msra.mxu0 0
          %342 = vmatprep.subr.bf16.mxu0 0
          %343 = vmatpush1.bf16.msra.mxu0 0
          %344 = vmatprep.subr.bf16.mxu0 0
          %345 = vmatpush1.bf16.msra.mxu0 0
          %346 = vmatprep.subr.bf16.mxu0 0
          %347 = vmatpush1.bf16.msra.mxu0 0
          %348 = vmatprep.subr.bf16.mxu0 0
          %349 = vmatpush1.bf16.msra.mxu0 0
          %350 = vmatprep.subr.bf16.mxu0 0
          %351 = vmatpush1.bf16.msra.mxu0 0
          %352 = vmatprep.subr.bf16.mxu0 0
          %353 = vmatpush1.bf16.msra.mxu0 0
          %354 = vmatprep.subr.bf16.mxu0 0
          %355 = vmatpush1.bf16.msra.mxu0 0
          %356 = vmatprep.mubr.bf16.mxu0 0
          %357 = vmatmul.mubr.bf16.gmra.mrb[0].mxu0 %v322
          %v358 = vpop.f32.mrb[0].mxu0
          %v359 = vadd.f32 0.0, %v358
          %v360 = vpop.f32.mrb[0].mxu0
          %v361 = vpop.f32.mrb[0].mxu0
          %v362 = vpop.f32.mrb[0].mxu0
          %363 = vdwg.mxu0
          %v364 = vpack.c.bf16 %v359, %v359
          %vm365 = vcmask 519168
          %366 = vst.msk [vmem:[#allocation2] sm:$0xf] %vm365, %v364
        $region60: #{tpu_custom_call.1} parent=39 // pred_fallthru
          _
        %s367 = smul.u32 %s29, 8
        %s368 = sshra.s32 %s367, 3
        %s369 = sand.u32 %s367, 7
        %s370 = smul.addr %s368, 4
        %s371 = scalar_lea.vmem %s259, %s370 [#allocation4]
        %v372 = vld [vmem:[%s371] sm:$0xf]
        %v373 = vld [vmem:[#allocation7] sm:$0xf]
        %v374 = vld [vmem:[#allocation7 + $0x4] sm:$0xf]
        %v375 = vld [vmem:[#allocation7 + $0x8] sm:$0xf]
        %v376 = vld [vmem:[#allocation7 + $0xc] sm:$0xf]
        %v381 = vunpack.c.l.b16 %v373
        %v382 = vunpack.c.l.b16 %v374
        %v383 = vunpack.c.l.b16 %v375
        %v384 = vunpack.c.l.b16 %v376
        %v385 = vpack.c.b16 %v382, %v381
        %v386 = vpack.c.b16 %v384, %v383
        %vm389 = vcmask 261120
        %v391 = vsel %vm389, %v372, 0
        %393 = vmatprep.subr.bf16.mxu0 0
        %394 = vmatpush1.bf16.msra.mxu0 %v385
        %395 = vmatprep.subr.bf16.mxu0 0
        %396 = vmatpush1.bf16.msra.mxu0 %v386
        %397 = vmatprep.subr.bf16.mxu0 0
        %398 = vmatpush1.bf16.msra.mxu0 0
        %399 = vmatprep.subr.bf16.mxu0 0
        %400 = vmatpush1.bf16.msra.mxu0 0
        %401 = vmatprep.subr.bf16.mxu0 0
        %402 = vmatpush1.bf16.msra.mxu0 0
        %403 = vmatprep.subr.bf16.mxu0 0
        %404 = vmatpush1.bf16.msra.mxu0 0
        %405 = vmatprep.subr.bf16.mxu0 0
        %406 = vmatpush1.bf16.msra.mxu0 0
        %407 = vmatprep.subr.bf16.mxu0 0
        %408 = vmatpush1.bf16.msra.mxu0 0
        %409 = vmatprep.subr.bf16.mxu0 0
        %410 = vmatpush1.bf16.msra.mxu0 0
        %411 = vmatprep.subr.bf16.mxu0 0
        %412 = vmatpush1.bf16.msra.mxu0 0
        %413 = vmatprep.subr.bf16.mxu0 0
        %414 = vmatpush1.bf16.msra.mxu0 0
        %415 = vmatprep.subr.bf16.mxu0 0
        %416 = vmatpush1.bf16.msra.mxu0 0
        %417 = vmatprep.subr.bf16.mxu0 0
        %418 = vmatpush1.bf16.msra.mxu0 0
        %419 = vmatprep.subr.bf16.mxu0 0
        %420 = vmatpush1.bf16.msra.mxu0 0
        %421 = vmatprep.subr.bf16.mxu0 0
        %422 = vmatpush1.bf16.msra.mxu0 0
        %423 = vmatprep.subr.bf16.mxu0 0
        %424 = vmatpush1.bf16.msra.mxu0 0
        %425 = vmatprep.mubr.bf16.mxu0 0
        %426 = vmatmul.mubr.bf16.gmra.mrb[0].mxu0 %v391
        %v427 = vpop.f32.mrb[0].mxu0
        %v428 = vadd.f32 0.0, %v427
        %v429 = vpop.f32.mrb[0].mxu0
        %v430 = vpop.f32.mrb[0].mxu0
        %v431 = vpop.f32.mrb[0].mxu0
        %432 = vdwg.mxu0
        %v433 = vpack.c.bf16 %v428, %v428
        %v434 = vlaneseq
        %v435 = vshrl.u32 %v434, 7
        %v436 = vstv %s367
        %v437 = vadd.s32 %v436, %v435
        %v438 = vlaneseq
        %v439 = vand.u32 %v438, 127
        %vm440 = vcmp.ge.s32.totalorder %v437, %v439
        %v441 = vld [vmem:[#allocation2] sm:$0xf]
        %vm442 = vcmask 64512
        %v444 = vsel %vm442, %v433, 0
        %v447 = vsel %vm442, %v441, 0
        %449 = vmatprep.subr.bf16.mxu0 0
        %450 = vmatpush1.bf16.xpose.msra.mxu0 %v447
        %451 = vmatprep.subr.bf16.mxu0 0
        %452 = vmatpush1.bf16.xpose.msra.mxu0 0
        %453 = vmatprep.subr.bf16.mxu0 0
        %454 = vmatpush1.bf16.xpose.msra.mxu0 0
        %455 = vmatprep.subr.bf16.mxu0 0
        %456 = vmatpush1.bf16.xpose.msra.mxu0 0
        %457 = vmatprep.subr.bf16.mxu0 0
        %458 = vmatpush1.bf16.xpose.msra.mxu0 0
        %459 = vmatprep.subr.bf16.mxu0 0
        %460 = vmatpush1.bf16.xpose.msra.mxu0 0
        %461 = vmatprep.subr.bf16.mxu0 0
        %462 = vmatpush1.bf16.xpose.msra.mxu0 0
        %463 = vmatprep.subr.bf16.mxu0 0
        %464 = vmatpush1.bf16.xpose.msra.mxu0 0
        %465 = vmatprep.subr.bf16.mxu0 0
        %466 = vmatpush1.bf16.xpose.msra.mxu0 0
        %467 = vmatprep.subr.bf16.mxu0 0
        %468 = vmatpush1.bf16.xpose.msra.mxu0 0
        %469 = vmatprep.subr.bf16.mxu0 0
        %470 = vmatpush1.bf16.xpose.msra.mxu0 0
        %471 = vmatprep.subr.bf16.mxu0 0
        %472 = vmatpush1.bf16.xpose.msra.mxu0 0
        %473 = vmatprep.subr.bf16.mxu0 0
        %474 = vmatpush1.bf16.xpose.msra.mxu0 0
        %475 = vmatprep.subr.bf16.mxu0 0
        %476 = vmatpush1.bf16.xpose.msra.mxu0 0
        %477 = vmatprep.subr.bf16.mxu0 0
        %478 = vmatpush1.bf16.xpose.msra.mxu0 0
        %479 = vmatprep.subr.bf16.mxu0 0
        %480 = vmatpush1.bf16.xpose.msra.mxu0 0
        %481 = vmatprep.mubr.bf16.mxu0 0
        %482 = vmatmul.mubr.bf16.gmra.mrb[0].mxu0 %v444
        %v483 = vpop.f32.mrb[0].mxu0
        %v484 = vadd.f32 0.0, %v483
        %v485 = vpop.f32.mrb[0].mxu0
        %v486 = vpop.f32.mrb[0].mxu0
        %v487 = vpop.f32.mrb[0].mxu0
        %488 = vdwg.mxu0
        %v489 = vsel %vm440, %v484, -1e+30
        %v490 = vsel %vm442, %v489, -inf
        %491 = vmax.xlane.f32.xlu0 %v490
        %v492 = vpop.xlane.xlu0 %491
        %v493 = vsub.f32 %v489, %v492
        %v494 = vmul.f32 %v493, 1.442695
        %v495 = vpow.pop %v494
        %v496 = vsel %vm442, %v495, 0.0
        %497 = vadd.xlane.f32.xlu0 %v496
        %v498 = vpop.xlane.xlu0 %497
        %v499 = vrcp.pop %v498
        %v500 = vmul.f32 %v495, %v499
        %v501 = vpack.c.bf16 %v500, %v500
        %v503 = vunpack.c.l.b16 %v441
        %v504 = vpack.c.b16 %v503, %v503
        %505 = vrot.lane.b32.xlu0 %v504, 96
        %v506 = vpop.permute.xlu0 %505
        %v508 = vsel %vm442, %v501, 0
        %vm510 = vcmask 1043456
        %v512 = vsel %vm510, %v506, 0
        %514 = vmatprep.subr.bf16.mxu0 0
        %515 = vmatpush1.bf16.msra.mxu0 %v512
        %516 = vmatprep.subr.bf16.mxu0 0
        %517 = vmatpush1.bf16.msra.mxu0 0
        %518 = vmatprep.subr.bf16.mxu0 0
        %519 = vmatpush1.bf16.msra.mxu0 0
        %520 = vmatprep.subr.bf16.mxu0 0
        %521 = vmatpush1.bf16.msra.mxu0 0
        %522 = vmatprep.subr.bf16.mxu0 0
        %523 = vmatpush1.bf16.msra.mxu0 0
        %524 = vmatprep.subr.bf16.mxu0 0
        %525 = vmatpush1.bf16.msra.mxu0 0
        %526 = vmatprep.subr.bf16.mxu0 0
        %527 = vmatpush1.bf16.msra.mxu0 0
        %528 = vmatprep.subr.bf16.mxu0 0
        %529 = vmatpush1.bf16.msra.mxu0 0
        %530 = vmatprep.subr.bf16.mxu0 0
        %531 = vmatpush1.bf16.msra.mxu0 0
        %532 = vmatprep.subr.bf16.mxu0 0
        %533 = vmatpush1.bf16.msra.mxu0 0
        %534 = vmatprep.subr.bf16.mxu0 0
        %535 = vmatpush1.bf16.msra.mxu0 0
        %536 = vmatprep.subr.bf16.mxu0 0
        %537 = vmatpush1.bf16.msra.mxu0 0
        %538 = vmatprep.subr.bf16.mxu0 0
        %539 = vmatpush1.bf16.msra.mxu0 0
        %540 = vmatprep.subr.bf16.mxu0 0
        %541 = vmatpush1.bf16.msra.mxu0 0
        %542 = vmatprep.subr.bf16.mxu0 0
        %543 = vmatpush1.bf16.msra.mxu0 0
        %544 = vmatprep.subr.bf16.mxu0 0
        %545 = vmatpush1.bf16.msra.mxu0 0
        %546 = vmatprep.mubr.bf16.mxu0 0
        %547 = vmatmul.mubr.bf16.gmra.mrb[0].mxu0 %v508
        %v548 = vpop.f32.mrb[0].mxu0
        %v549 = vadd.f32 0.0, %v548
        %v550 = vpop.f32.mrb[0].mxu0
        %v551 = vpop.f32.mrb[0].mxu0
        %v552 = vpop.f32.mrb[0].mxu0
        %553 = vdwg.mxu0
        %v554 = vpack.c.bf16 %v549, %v549
        %vm555 = vcmask 60416
        %556 = vst.msk [vmem:[#allocation3] sm:$0xf] %vm555, %v554
        %v557 = vld [vmem:[#allocation2] sm:$0xf]
        %559 = vrot.lane.b32.xlu0 %v433, 120
        %v560 = vpop.permute.xlu0 %559
        %v562 = vunpack.c.l.b16 %v557
        %v563 = vpack.c.b16 %v562, %v562
        %564 = vrot.lane.b32.xlu0 %v563, 120
        %v565 = vpop.permute.xlu0 %564
        %v567 = vsel %vm442, %v560, 0
        %v570 = vsel %vm442, %v565, 0
        %572 = vmatprep.subr.bf16.mxu0 0
        %573 = vmatpush1.bf16.xpose.msra.mxu0 %v570
        %574 = vmatprep.subr.bf16.mxu0 0
        %575 = vmatpush1.bf16.xpose.msra.mxu0 0
        %576 = vmatprep.subr.bf16.mxu0 0
        %577 = vmatpush1.bf16.xpose.msra.mxu0 0
        %578 = vmatprep.subr.bf16.mxu0 0
        %579 = vmatpush1.bf16.xpose.msra.mxu0 0
        %580 = vmatprep.subr.bf16.mxu0 0
        %581 = vmatpush1.bf16.xpose.msra.mxu0 0
        %582 = vmatprep.subr.bf16.mxu0 0
        %583 = vmatpush1.bf16.xpose.msra.mxu0 0
        %584 = vmatprep.subr.bf16.mxu0 0
        %585 = vmatpush1.bf16.xpose.msra.mxu0 0
        %586 = vmatprep.subr.bf16.mxu0 0
        %587 = vmatpush1.bf16.xpose.msra.mxu0 0
        %588 = vmatprep.subr.bf16.mxu0 0
        %589 = vmatpush1.bf16.xpose.msra.mxu0 0
        %590 = vmatprep.subr.bf16.mxu0 0
        %591 = vmatpush1.bf16.xpose.msra.mxu0 0
        %592 = vmatprep.subr.bf16.mxu0 0
        %593 = vmatpush1.bf16.xpose.msra.mxu0 0
        %594 = vmatprep.subr.bf16.mxu0 0
        %595 = vmatpush1.bf16.xpose.msra.mxu0 0
        %596 = vmatprep.subr.bf16.mxu0 0
        %597 = vmatpush1.bf16.xpose.msra.mxu0 0
        %598 = vmatprep.subr.bf16.mxu0 0
        %599 = vmatpush1.bf16.xpose.msra.mxu0 0
        %600 = vmatprep.subr.bf16.mxu0 0
        %601 = vmatpush1.bf16.xpose.msra.mxu0 0
        %602 = vmatprep.subr.bf16.mxu0 0
        %603 = vmatpush1.bf16.xpose.msra.mxu0 0
        %604 = vmatprep.mubr.bf16.mxu0 0
        %605 = vmatmul.mubr.bf16.gmra.mrb[0].mxu0 %v567
        %v606 = vpop.f32.mrb[0].mxu0
        %v607 = vadd.f32 0.0, %v606
        %v608 = vpop.f32.mrb[0].mxu0
        %v609 = vpop.f32.mrb[0].mxu0
        %v610 = vpop.f32.mrb[0].mxu0
        %611 = vdwg.mxu0
        %v612 = vsel %vm440, %v607, -1e+30
        %v613 = vsel %vm442, %v612, -inf
        %614 = vmax.xlane.f32.xlu0 %v613
        %v615 = vpop.xlane.xlu0 %614
        %v616 = vsub.f32 %v612, %v615
        %v617 = vmul.f32 %v616, 1.442695
        %v618 = vpow.pop %v617
        %v619 = vsel %vm442, %v618, 0.0
        %620 = vadd.xlane.f32.xlu0 %v619
        %v621 = vpop.xlane.xlu0 %620
        %v622 = vrcp.pop %v621
        %v623 = vmul.f32 %v618, %v622
        %v624 = vpack.c.bf16 %v623, %v623
        %625 = vrot.lane.b32.xlu0 %v563, 88
        %v626 = vpop.permute.xlu0 %625
        %v628 = vsel %vm442, %v624, 0
        %v631 = vsel %vm510, %v626, 0
        %633 = vmatprep.subr.bf16.mxu0 0
        %634 = vmatpush1.bf16.msra.mxu0 %v631
        %635 = vmatprep.subr.bf16.mxu0 0
        %636 = vmatpush1.bf16.msra.mxu0 0
        %637 = vmatprep.subr.bf16.mxu0 0
        %638 = vmatpush1.bf16.msra.mxu0 0
        %639 = vmatprep.subr.bf16.mxu0 0
        %640 = vmatpush1.bf16.msra.mxu0 0
        %641 = vmatprep.subr.bf16.mxu0 0
        %642 = vmatpush1.bf16.msra.mxu0 0
        %643 = vmatprep.subr.bf16.mxu0 0
        %644 = vmatpush1.bf16.msra.mxu0 0
        %645 = vmatprep.subr.bf16.mxu0 0
        %646 = vmatpush1.bf16.msra.mxu0 0
        %647 = vmatprep.subr.bf16.mxu0 0
        %648 = vmatpush1.bf16.msra.mxu0 0
        %649 = vmatprep.subr.bf16.mxu0 0
        %650 = vmatpush1.bf16.msra.mxu0 0
        %651 = vmatprep.subr.bf16.mxu0 0
        %652 = vmatpush1.bf16.msra.mxu0 0
        %653 = vmatprep.subr.bf16.mxu0 0
        %654 = vmatpush1.bf16.msra.mxu0 0
        %655 = vmatprep.subr.bf16.mxu0 0
        %656 = vmatpush1.bf16.msra.mxu0 0
        %657 = vmatprep.subr.bf16.mxu0 0
        %658 = vmatpush1.bf16.msra.mxu0 0
        %659 = vmatprep.subr.bf16.mxu0 0
        %660 = vmatpush1.bf16.msra.mxu0 0
        %661 = vmatprep.subr.bf16.mxu0 0
        %662 = vmatpush1.bf16.msra.mxu0 0
        %663 = vmatprep.subr.bf16.mxu0 0
        %664 = vmatpush1.bf16.msra.mxu0 0
        %665 = vmatprep.mubr.bf16.mxu0 0
        %666 = vmatmul.mubr.bf16.gmra.mrb[0].mxu0 %v628
        %v667 = vpop.f32.mrb[0].mxu0
        %v668 = vadd.f32 0.0, %v667
        %v669 = vpop.f32.mrb[0].mxu0
        %v670 = vpop.f32.mrb[0].mxu0
        %v671 = vpop.f32.mrb[0].mxu0
        %672 = vdwg.mxu0
        %v673 = vpack.c.bf16 %v668, %v668
        %v675 = vunpack.c.l.b16 %v673
        %v676 = vpack.c.b16 %v675, %v675
        %677 = vrot.lane.b32.xlu0 %v676, 8
        %v678 = vpop.permute.xlu0 %677
        %vm680 = vcmask 126016
        %681 = vst.msk [vmem:[#allocation3] sm:$0xf] %vm680, %v678
        %v682 = vld [vmem:[#allocation2] sm:$0xf]
        %683 = vrot.lane.b32.xlu0 %v433, 112
        %v684 = vpop.permute.xlu0 %683
        %v686 = vunpack.c.l.b16 %v682
        %v687 = vpack.c.b16 %v686, %v686
        %688 = vrot.lane.b32.xlu0 %v687, 112
        %v689 = vpop.permute.xlu0 %688
        %v691 = vsel %vm442, %v684, 0
        %v694 = vsel %vm442, %v689, 0
        %696 = vmatprep.subr.bf16.mxu0 0
        %697 = vmatpush1.bf16.xpose.msra.mxu0 %v694
        %698 = vmatprep.subr.bf16.mxu0 0
        %699 = vmatpush1.bf16.xpose.msra.mxu0 0
        %700 = vmatprep.subr.bf16.mxu0 0
        %701 = vmatpush1.bf16.xpose.msra.mxu0 0
        %702 = vmatprep.subr.bf16.mxu0 0
        %703 = vmatpush1.bf16.xpose.msra.mxu0 0
        %704 = vmatprep.subr.bf16.mxu0 0
        %705 = vmatpush1.bf16.xpose.msra.mxu0 0
        %706 = vmatprep.subr.bf16.mxu0 0
        %707 = vmatpush1.bf16.xpose.msra.mxu0 0
        %708 = vmatprep.subr.bf16.mxu0 0
        %709 = vmatpush1.bf16.xpose.msra.mxu0 0
        %710 = vmatprep.subr.bf16.mxu0 0
        %711 = vmatpush1.bf16.xpose.msra.mxu0 0
        %712 = vmatprep.subr.bf16.mxu0 0
        %713 = vmatpush1.bf16.xpose.msra.mxu0 0
        %714 = vmatprep.subr.bf16.mxu0 0
        %715 = vmatpush1.bf16.xpose.msra.mxu0 0
        %716 = vmatprep.subr.bf16.mxu0 0
        %717 = vmatpush1.bf16.xpose.msra.mxu0 0
        %718 = vmatprep.subr.bf16.mxu0 0
        %719 = vmatpush1.bf16.xpose.msra.mxu0 0
        %720 = vmatprep.subr.bf16.mxu0 0
        %721 = vmatpush1.bf16.xpose.msra.mxu0 0
        %722 = vmatprep.subr.bf16.mxu0 0
        %723 = vmatpush1.bf16.xpose.msra.mxu0 0
        %724 = vmatprep.subr.bf16.mxu0 0
        %725 = vmatpush1.bf16.xpose.msra.mxu0 0
        %726 = vmatprep.subr.bf16.mxu0 0
        %727 = vmatpush1.bf16.xpose.msra.mxu0 0
        %728 = vmatprep.mubr.bf16.mxu0 0
        %729 = vmatmul.mubr.bf16.gmra.mrb[0].mxu0 %v691
        %v730 = vpop.f32.mrb[0].mxu0
        %v731 = vadd.f32 0.0, %v730
        %v732 = vpop.f32.mrb[0].mxu0
        %v733 = vpop.f32.mrb[0].mxu0
        %v734 = vpop.f32.mrb[0].mxu0
        %735 = vdwg.mxu0
        %v736 = vsel %vm440, %v731, -1e+30
        %v737 = vsel %vm442, %v736, -inf
        %738 = vmax.xlane.f32.xlu0 %v737
        %v739 = vpop.xlane.xlu0 %738
        %v740 = vsub.f32 %v736, %v739
        %v741 = vmul.f32 %v740, 1.442695
        %v742 = vpow.pop %v741
        %v743 = vsel %vm442, %v742, 0.0
        %744 = vadd.xlane.f32.xlu0 %v743
        %v745 = vpop.xlane.xlu0 %744
        %v746 = vrcp.pop %v745
        %v747 = vmul.f32 %v742, %v746
        %v748 = vpack.c.bf16 %v747, %v747
        %749 = vrot.lane.b32.xlu0 %v687, 80
        %v750 = vpop.permute.xlu0 %749
        %v752 = vsel %vm442, %v748, 0
        %v755 = vsel %vm510, %v750, 0
        %757 = vmatprep.subr.bf16.mxu0 0
        %758 = vmatpush1.bf16.msra.mxu0 %v755
        %759 = vmatprep.subr.bf16.mxu0 0
        %760 = vmatpush1.bf16.msra.mxu0 0
        %761 = vmatprep.subr.bf16.mxu0 0
        %762 = vmatpush1.bf16.msra.mxu0 0
        %763 = vmatprep.subr.bf16.mxu0 0
        %764 = vmatpush1.bf16.msra.mxu0 0
        %765 = vmatprep.subr.bf16.mxu0 0
        %766 = vmatpush1.bf16.msra.mxu0 0
        %767 = vmatprep.subr.bf16.mxu0 0
        %768 = vmatpush1.bf16.msra.mxu0 0
        %769 = vmatprep.subr.bf16.mxu0 0
        %770 = vmatpush1.bf16.msra.mxu0 0
        %771 = vmatprep.subr.bf16.mxu0 0
        %772 = vmatpush1.bf16.msra.mxu0 0
        %773 = vmatprep.subr.bf16.mxu0 0
        %774 = vmatpush1.bf16.msra.mxu0 0
        %775 = vmatprep.subr.bf16.mxu0 0
        %776 = vmatpush1.bf16.msra.mxu0 0
        %777 = vmatprep.subr.bf16.mxu0 0
        %778 = vmatpush1.bf16.msra.mxu0 0
        %779 = vmatprep.subr.bf16.mxu0 0
        %780 = vmatpush1.bf16.msra.mxu0 0
        %781 = vmatprep.subr.bf16.mxu0 0
        %782 = vmatpush1.bf16.msra.mxu0 0
        %783 = vmatprep.subr.bf16.mxu0 0
        %784 = vmatpush1.bf16.msra.mxu0 0
        %785 = vmatprep.subr.bf16.mxu0 0
        %786 = vmatpush1.bf16.msra.mxu0 0
        %787 = vmatprep.subr.bf16.mxu0 0
        %788 = vmatpush1.bf16.msra.mxu0 0
        %789 = vmatprep.mubr.bf16.mxu0 0
        %790 = vmatmul.mubr.bf16.gmra.mrb[0].mxu0 %v752
        %v791 = vpop.f32.mrb[0].mxu0
        %v792 = vadd.f32 0.0, %v791
        %v793 = vpop.f32.mrb[0].mxu0
        %v794 = vpop.f32.mrb[0].mxu0
        %v795 = vpop.f32.mrb[0].mxu0
        %796 = vdwg.mxu0
        %v797 = vpack.c.bf16 %v792, %v792
        %v799 = vunpack.c.l.b16 %v797
        %v800 = vpack.c.b16 %v799, %v799
        %801 = vrot.lane.b32.xlu0 %v800, 16
        %v802 = vpop.permute.xlu0 %801
        %vm804 = vcmask 191616
        %805 = vst.msk [vmem:[#allocation3] sm:$0xf] %vm804, %v802
        %v806 = vld [vmem:[#allocation2] sm:$0xf]
        %807 = vrot.lane.b32.xlu0 %v433, 104
        %v808 = vpop.permute.xlu0 %807
        %v810 = vunpack.c.l.b16 %v806
        %v811 = vpack.c.b16 %v810, %v810
        %812 = vrot.lane.b32.xlu0 %v811, 104
        %v813 = vpop.permute.xlu0 %812
        %v815 = vsel %vm442, %v808, 0
        %v818 = vsel %vm442, %v813, 0
        %820 = vmatprep.subr.bf16.mxu0 0
        %821 = vmatpush1.bf16.xpose.msra.mxu0 %v818
        %822 = vmatprep.subr.bf16.mxu0 0
        %823 = vmatpush1.bf16.xpose.msra.mxu0 0
        %824 = vmatprep.subr.bf16.mxu0 0
        %825 = vmatpush1.bf16.xpose.msra.mxu0 0
        %826 = vmatprep.subr.bf16.mxu0 0
        %827 = vmatpush1.bf16.xpose.msra.mxu0 0
        %828 = vmatprep.subr.bf16.mxu0 0
        %829 = vmatpush1.bf16.xpose.msra.mxu0 0
        %830 = vmatprep.subr.bf16.mxu0 0
        %831 = vmatpush1.bf16.xpose.msra.mxu0 0
        %832 = vmatprep.subr.bf16.mxu0 0
        %833 = vmatpush1.bf16.xpose.msra.mxu0 0
        %834 = vmatprep.subr.bf16.mxu0 0
        %835 = vmatpush1.bf16.xpose.msra.mxu0 0
        %836 = vmatprep.subr.bf16.mxu0 0
        %837 = vmatpush1.bf16.xpose.msra.mxu0 0
        %838 = vmatprep.subr.bf16.mxu0 0
        %839 = vmatpush1.bf16.xpose.msra.mxu0 0
        %840 = vmatprep.subr.bf16.mxu0 0
        %841 = vmatpush1.bf16.xpose.msra.mxu0 0
        %842 = vmatprep.subr.bf16.mxu0 0
        %843 = vmatpush1.bf16.xpose.msra.mxu0 0
        %844 = vmatprep.subr.bf16.mxu0 0
        %845 = vmatpush1.bf16.xpose.msra.mxu0 0
        %846 = vmatprep.subr.bf16.mxu0 0
        %847 = vmatpush1.bf16.xpose.msra.mxu0 0
        %848 = vmatprep.subr.bf16.mxu0 0
        %849 = vmatpush1.bf16.xpose.msra.mxu0 0
        %850 = vmatprep.subr.bf16.mxu0 0
        %851 = vmatpush1.bf16.xpose.msra.mxu0 0
        %852 = vmatprep.mubr.bf16.mxu0 0
        %853 = vmatmul.mubr.bf16.gmra.mrb[0].mxu0 %v815
        %v854 = vpop.f32.mrb[0].mxu0
        %v855 = vadd.f32 0.0, %v854
        %v856 = vpop.f32.mrb[0].mxu0
        %v857 = vpop.f32.mrb[0].mxu0
        %v858 = vpop.f32.mrb[0].mxu0
        %859 = vdwg.mxu0
        %v860 = vsel %vm440, %v855, -1e+30
        %v861 = vsel %vm442, %v860, -inf
        %862 = vmax.xlane.f32.xlu0 %v861
        %v863 = vpop.xlane.xlu0 %862
        %v864 = vsub.f32 %v860, %v863
        %v865 = vmul.f32 %v864, 1.442695
        %v866 = vpow.pop %v865
        %v867 = vsel %vm442, %v866, 0.0
        %868 = vadd.xlane.f32.xlu0 %v867
        %v869 = vpop.xlane.xlu0 %868
        %v870 = vrcp.pop %v869
        %v871 = vmul.f32 %v866, %v870
        %v872 = vpack.c.bf16 %v871, %v871
        %873 = vrot.lane.b32.xlu0 %v811, 72
        %v874 = vpop.permute.xlu0 %873
        %v876 = vsel %vm442, %v872, 0
        %v879 = vsel %vm510, %v874, 0
        %881 = vmatprep.subr.bf16.mxu0 0
        %882 = vmatpush1.bf16.msra.mxu0 %v879
        %883 = vmatprep.subr.bf16.mxu0 0
        %884 = vmatpush1.bf16.msra.mxu0 0
        %885 = vmatprep.subr.bf16.mxu0 0
        %886 = vmatpush1.bf16.msra.mxu0 0
        %887 = vmatprep.subr.bf16.mxu0 0
        %888 = vmatpush1.bf16.msra.mxu0 0
        %889 = vmatprep.subr.bf16.mxu0 0
        %890 = vmatpush1.bf16.msra.mxu0 0
        %891 = vmatprep.subr.bf16.mxu0 0
        %892 = vmatpush1.bf16.msra.mxu0 0
        %893 = vmatprep.subr.bf16.mxu0 0
        %894 = vmatpush1.bf16.msra.mxu0 0
        %895 = vmatprep.subr.bf16.mxu0 0
        %896 = vmatpush1.bf16.msra.mxu0 0
        %897 = vmatprep.subr.bf16.mxu0 0
        %898 = vmatpush1.bf16.msra.mxu0 0
        %899 = vmatprep.subr.bf16.mxu0 0
        %900 = vmatpush1.bf16.msra.mxu0 0
        %901 = vmatprep.subr.bf16.mxu0 0
        %902 = vmatpush1.bf16.msra.mxu0 0
        %903 = vmatprep.subr.bf16.mxu0 0
        %904 = vmatpush1.bf16.msra.mxu0 0
        %905 = vmatprep.subr.bf16.mxu0 0
        %906 = vmatpush1.bf16.msra.mxu0 0
        %907 = vmatprep.subr.bf16.mxu0 0
        %908 = vmatpush1.bf16.msra.mxu0 0
        %909 = vmatprep.subr.bf16.mxu0 0
        %910 = vmatpush1.bf16.msra.mxu0 0
        %911 = vmatprep.subr.bf16.mxu0 0
        %912 = vmatpush1.bf16.msra.mxu0 0
        %913 = vmatprep.mubr.bf16.mxu0 0
        %914 = vmatmul.mubr.bf16.gmra.mrb[0].mxu0 %v876
        %v915 = vpop.f32.mrb[0].mxu0
        %v916 = vadd.f32 0.0, %v915
        %v917 = vpop.f32.mrb[0].mxu0
        %v918 = vpop.f32.mrb[0].mxu0
        %v919 = vpop.f32.mrb[0].mxu0
        %920 = vdwg.mxu0
        %v921 = vpack.c.bf16 %v916, %v916
        %v923 = vunpack.c.l.b16 %v921
        %v924 = vpack.c.b16 %v923, %v923
        %925 = vrot.lane.b32.xlu0 %v924, 24
        %v926 = vpop.permute.xlu0 %925
        %vm928 = vcmask 257216
        %929 = vst.msk [vmem:[#allocation3] sm:$0xf] %vm928, %v926
        %v930 = vld [vmem:[#allocation3] sm:$0xf]
        %v931 = vld [vmem:[#allocation10] sm:$0xf]
        %v932 = vld [vmem:[#allocation10 + $0x4] sm:$0xf]
        %v933 = vld [vmem:[#allocation10 + $0x8] sm:$0xf]
        %v934 = vld [vmem:[#allocation10 + $0xc] sm:$0xf]
        %v935 = vld [vmem:[%s4] sm:$0x1]
        %v937 = vlaneseq
        %v938 = vshrl.u32 %v937, 7
        %v939 = vsub.s32 0, %v938
        %v940 = vrot.slane %v935, %v939
        %v946 = vunpack.c.l.b16 %v931
        %v947 = vunpack.c.l.b16 %v932
        %v948 = vunpack.c.l.b16 %v933
        %v949 = vunpack.c.l.b16 %v934
        %v950 = vpack.c.b16 %v947, %v946
        %v951 = vpack.c.b16 %v949, %v948
        %v955 = vsel %vm389, %v930, 0
        %957 = vmatprep.subr.bf16.mxu0 0
        %958 = vmatpush1.bf16.msra.mxu0 %v950
        %959 = vmatprep.subr.bf16.mxu0 0
        %960 = vmatpush1.bf16.msra.mxu0 %v951
        %961 = vmatprep.subr.bf16.mxu0 0
        %962 = vmatpush1.bf16.msra.mxu0 0
        %963 = vmatprep.subr.bf16.mxu0 0
        %964 = vmatpush1.bf16.msra.mxu0 0
        %965 = vmatprep.subr.bf16.mxu0 0
        %966 = vmatpush1.bf16.msra.mxu0 0
        %967 = vmatprep.subr.bf16.mxu0 0
        %968 = vmatpush1.bf16.msra.mxu0 0
        %969 = vmatprep.subr.bf16.mxu0 0
        %970 = vmatpush1.bf16.msra.mxu0 0
        %971 = vmatprep.subr.bf16.mxu0 0
        %972 = vmatpush1.bf16.msra.mxu0 0
        %973 = vmatprep.subr.bf16.mxu0 0
        %974 = vmatpush1.bf16.msra.mxu0 0
        %975 = vmatprep.subr.bf16.mxu0 0
        %976 = vmatpush1.bf16.msra.mxu0 0
        %977 = vmatprep.subr.bf16.mxu0 0
        %978 = vmatpush1.bf16.msra.mxu0 0
        %979 = vmatprep.subr.bf16.mxu0 0
        %980 = vmatpush1.bf16.msra.mxu0 0
        %981 = vmatprep.subr.bf16.mxu0 0
        %982 = vmatpush1.bf16.msra.mxu0 0
        %983 = vmatprep.subr.bf16.mxu0 0
        %984 = vmatpush1.bf16.msra.mxu0 0
        %985 = vmatprep.subr.bf16.mxu0 0
        %986 = vmatpush1.bf16.msra.mxu0 0
        %987 = vmatprep.subr.bf16.mxu0 0
        %988 = vmatpush1.bf16.msra.mxu0 0
        %989 = vmatprep.mubr.bf16.mxu0 0
        %990 = vmatmul.mubr.bf16.gmra.mrb[0].mxu0 %v955
        %v991 = vpop.f32.mrb[0].mxu0
        %v992 = vadd.f32 %v940, %v991
        %v993 = vpop.f32.mrb[0].mxu0
        %v994 = vpop.f32.mrb[0].mxu0
        %v995 = vpop.f32.mrb[0].mxu0
        %996 = vdwg.mxu0
        %997 = vst.msk [vmem:[%s297] sm:$0xff] %vm389, %v992
        %s998 = sand.u32 %s156, 1
        %s999 = scalar_lea.sflag [#allocation6], %s998
        %s1000 = sand.u32 %s156, 1
        %s1001 = smul.addr %s1000, 8
        %s1002 = scalar_lea.vmem [#allocation12], %s1001
        // Predicated region
        $region61: #{tpu_custom_call.1} parent=39 // pred_check
          %p1003 = pneg %p166
        $region62: #{tpu_custom_call.1} parent=39 // pred_check_branch
          %1005 = sbr.rel (%p1003) target = $region64
        $region63: #{tpu_custom_call.1} parent=39 // pred_region
          %s1007 = ssub.s32 128, 128
          %1008 = vsyncadd %s999, %s1007
          %s1009 = sadd.s32 %s29, %s28
          %s1010 = smul.addr %s1009, 128
          %s1011 = scalar_lea.hbm %s5, %s1010
          %s1013 = sshll.u32 %s1002, 4
          %s1014 = int_to_ptr.vmem [resolvable:$true] %s1013
          %1016 = dma.vmem_to_hbm [thread:$0]  %s1014, 128, %s1011, %s999
        $region64: #{tpu_custom_call.1} parent=39 // pred_fallthru
          _
      $region40: #{tpu_custom_call.1} parent=5 // pred_fallthru
        _
      %p1017 = scmp.le.s32.totalorder 2, %s19
      // Predicated region
      $region65: #{tpu_custom_call.1} parent=5 // pred_check
        %p1018 = pneg %p1017
      $region66: #{tpu_custom_call.1} parent=5 // pred_check_branch
        %1020 = sbr.rel (%p1018) target = $region68
      $region67: #{tpu_custom_call.1} parent=5 // pred_region
        %s1021 = ssub.s32 %s19, 2
        // Predicated region
        $region69: #{tpu_custom_call.1} parent=67 // pred_check
          %p1022 = pneg %p172
        $region70: #{tpu_custom_call.1} parent=67 // pred_check_branch
          %1024 = sbr.rel (%p1022) target = $region72
        $region71: #{tpu_custom_call.1} parent=67 // pred_region
          %s1025 = sand.u32 %s157, 1
          %s1026 = scalar_lea.sflag [#allocation6], %s1025
          %s1027 = sand.u32 %s157, 1
          %s1028 = smul.addr %s1027, 8
          %s1029 = scalar_lea.vmem [#allocation12], %s1028
          %1030 = dma.done %s1026, 128
        $region72: #{tpu_custom_call.1} parent=67 // pred_fallthru
          _
      $region68: #{tpu_custom_call.1} parent=5 // pred_fallthru
        _
    $region6: #{tpu_custom_call.1} parent=1 // loop_footer
      %s23 = sadd.s32 1, %s19
    $region7: #{tpu_custom_call.1} parent=1 // loop_footer_branch
      %18 = sbr.rel target = $region3
    $region8: #{tpu_custom_call.1} parent=1 // loop_exit
      _
    %1031 = vsyncpa [#allocation5], 1
    %s1032 = scalar_lea.sflag [#allocation5], 1
    %1033 = vsyncpa %s1032, 1
    %1034 = vsyncpa [#allocation8], 1
    %1035 = vsyncpa [#allocation11], 1
    %1036 = vsyncpa [#allocation6], 1
    %s1037 = scalar_lea.sflag [#allocation6], 1
    %1038 = vsyncpa %s1037, 1

</llo_original>
